<compile_context>
chip_gen: v7x
topology: tpu7x:2x2x1
jax: 0.10.0
libtpu: 0.0.40
codegen_flags: <defaults>
</compile_context>

<pallas_src>
import jax
import jax.numpy as jnp
from jax.experimental import pallas as pl
from jax.experimental.pallas import tpu as pltpu


def _cdiv(a, b):
    return -(-a // b)


def _round_up(a, m):
    return _cdiv(a, m) * m


def _block_diag(mats):
    rows = sum(m.shape[0] for m in mats)
    cols = sum(m.shape[1] for m in mats)
    out = jnp.zeros((rows, cols), dtype=mats[0].dtype)
    r = c = 0
    for m in mats:
        out = out.at[r:r + m.shape[0], c:c + m.shape[1]].set(m)
        r += m.shape[0]
        c += m.shape[1]
    return out


def _make_lrtf_kernel(n_in, chunks, rank, output_dim):
    """n_in streamed inputs; input i carries chunks[i] modalities packed on the lane dim."""
    ro = rank * output_dim

    def kernel(*refs):
        x_refs = refs[:n_in]                   # (TB, D_i)                bf16, streamed
        w_refs = refs[n_in:2 * n_in]           # (D_i, chunks[i]*rank*O)  bf16, resident
        b_refs = refs[2 * n_in:3 * n_in]       # (1,   chunks[i]*rank*O)  f32,  resident
        bias_ref = refs[3 * n_in]              # (1, O)                   f32,  resident
        o_ref = refs[3 * n_in + 1]             # (TB, O)

        fused = None
        for x_ref, w_ref, b_ref, nchunk in zip(x_refs, w_refs, b_refs, chunks):
            # One wide MXU matmul per input, f32 accumulation; ones-concat absorbed
            # as the bias row.
            p = jnp.dot(x_ref[...], w_ref[...],
                        preferred_element_type=jnp.float32) + b_ref[...]
            for c in range(nchunk):
                blk = p[:, c * ro:(c + 1) * ro] if nchunk > 1 else p
                fused = blk if fused is None else fused * blk          # VPU, f32

        # Weighted rank reduction: fusion_weights were folded into modality 0's
        # columns in the wrapper, so this is a plain unrolled lane-slice sum.
        out = fused[:, 0:output_dim]
        for r in range(1, rank):
            out = out + fused[:, r * output_dim:(r + 1) * output_dim]
        out = out + bias_ref[...]
        # TODO(synk): when output_dim < 128, repack the (TB, O) tile into a lane-dense
        # (TB*O/128, 128) view before the store to avoid masked vst partial stores.
        o_ref[...] = out.astype(o_ref.dtype)

    return kernel


def low_rank_tensor_fusion(modalities, factors, fusion_weights, fusion_bias,
                           output_dim, rank, flatten=True, batch_tile=1024,
                           pack_feature_limit=1024, compute_dtype=jnp.bfloat16):
    """JAX wrapper; weight re-layout is a one-time cost under jit in practice."""
    batch = modalities[0].shape[0]
    out_dtype = modalities[0].dtype
    ro = rank * output_dim

    # Raw (B, D_m) modalities -- no ones-concat, no augmented copy.
    xs = [m.reshape(batch, -1) if flatten else m for m in modalities]
    n_mod = len(xs)

    # Fold rank into the matmul N dim; split the ones-row off as a bias row.
    w_mats, b_rows = [], []
    for f in factors:
        r_, dp1, o_ = f.shape
        fw = jnp.transpose(f, (1, 0, 2)).reshape(dp1, r_ * o_)        # (D+1, rank*O)
        w_mats.append(fw[1:, :].astype(jnp.float32))                   # (D, rank*O)
        b_rows.append(fw[0:1, :].astype(jnp.float32))                  # (1, rank*O)

    # Fold fusion_weights into modality 0 (exact): column block r scaled by w[0, r].
    col_scale = jnp.repeat(fusion_weights.reshape(-1).astype(jnp.float32), output_dim)
    w_mats[0] = w_mats[0] * col_scale[None, :]
    b_rows[0] = b_rows[0] * col_scale[None, :]

    # Pack tiny-K modalities into one wide matmul against a block-diagonal weight;
    # keep separate per-modality matmuls when feature dims are large.
    total_d = sum(x.shape[1] for x in xs)
    if n_mod > 1 and total_d <= pack_feature_limit:
        x_list = [jnp.concatenate(xs, axis=1)]
        w_list = [_block_diag(w_mats)]
        b_list = [jnp.concatenate(b_rows, axis=1)]
        chunks = (n_mod,)
    else:
        x_list, w_list, b_list = list(xs), list(w_mats), list(b_rows)
        chunks = (1,) * n_mod
    n_in = len(x_list)

    # bf16 operands, f32 accumulation; tiny bias rows stay f32.
    x_list = [x.astype(compute_dtype) for x in x_list]
    w_list = [w.astype(compute_dtype) for w in w_list]
    b_list = [b.astype(jnp.float32) for b in b_list]
    fusion_bias = fusion_bias.astype(jnp.float32)

    in_dims = [x.shape[1] for x in x_list]
    widths = [w.shape[1] for w in w_list]
    out_itemsize = jnp.dtype(out_dtype).itemsize
    x_itemsize = jnp.dtype(compute_dtype).itemsize

    # ---- batch tiling: never collapse to grid=(1,) unless batch itself is tiny ----
    if batch <= 8:
        tb = batch
    elif batch <= batch_tile:
        tb = max(8, _round_up(_cdiv(batch, 4), 8))    # >=4 tiles -> both v7x TCs busy
    else:
        tb = batch_tile

    def footprint(t):
        stream = sum(2 * t * d * x_itemsize for d in in_dims)          # dbl-buffered xs
        resident = sum(2 * w.size * x_itemsize for w in w_list)
        resident += sum(b.size * 4 for b in b_list) + fusion_bias.size * 4
        interm = t * sum(widths) * 4 + t * ro * 4                      # p's + fused, f32
        return stream + resident + interm + 2 * t * output_dim * out_itemsize

    # Fit v7x's 64 MiB VMEM (and the 32 MiB scoped default) with headroom; the same
    # budget is comfortably inside v5e/v6e's 128 MiB physical VMEM.
    while tb > 8 and footprint(tb) > (40 << 20):
        tb = max(8, _round_up(tb // 2, 8))
    vmem_limit = int(min(48 << 20, max(footprint(tb) * 5 // 4 + (4 << 20), 16 << 20)))

    grid = (_cdiv(batch, tb),)
    kernel = _make_lrtf_kernel(n_in, chunks, rank, output_dim)

    flops = (2 * batch * sum(d * w for d, w in zip(in_dims, widths))
             + 2 * batch * n_mod * ro)
    bytes_accessed = (sum(x.size * x_itemsize for x in x_list)
                      + sum(w.size * x_itemsize for w in w_list)
                      + sum(b.size * 4 for b in b_list) + fusion_bias.size * 4
                      + batch * output_dim * out_itemsize)

    def build(single_buffer_weights):
        def resident(shape):
            if single_buffer_weights:
                # Constant index_map -> a second pipeline buffer is pure VMEM waste.
                return pl.BlockSpec(shape, lambda i: (0, 0),
                                    pipeline_mode=pl.Buffered(1))
            return pl.BlockSpec(shape, lambda i: (0, 0))

        in_specs = ([pl.BlockSpec((tb, d), lambda i: (i, 0)) for d in in_dims]
                    + [resident(w.shape) for w in w_list]
                    + [resident(b.shape) for b in b_list]
                    + [resident(fusion_bias.shape)])
        out_specs = pl.BlockSpec((tb, output_dim), lambda i: (i, 0))
        return pl.pallas_call(
            kernel,
            out_shape=jax.ShapeDtypeStruct((batch, output_dim), out_dtype),
            grid=grid,
            in_specs=in_specs,
            out_specs=out_specs,
            compiler_params=pltpu.CompilerParams(
                dimension_semantics=("parallel",),
                vmem_limit_bytes=vmem_limit),
            cost_estimate=pl.CostEstimate(flops=flops, transcendentals=0,
                                          bytes_accessed=bytes_accessed),
        )

    args = (*x_list, *w_list, *b_list, fusion_bias)
    try:
        out = build(True)(*args)        # single-buffered constant weights
    except Exception:                   # pipeline_mode / Buffered(1) unsupported here
        out = build(False)(*args)

    # Mirrors torch's .squeeze().view(-1, output_dim).
    return out.reshape(-1, output_dim)


def _xavier_normal(key, shape):
    # PyTorch xavier_normal fan computation for an N-D tensor.
    receptive = 1
    for s in shape[2:]:
        receptive *= s
    fan_in = shape[1] * receptive
    fan_out = shape[0] * receptive
    std = (2.0 / (fan_in + fan_out)) ** 0.5
    return std * jax.random.normal(key, shape, dtype=jnp.float32)


def _reference(modalities, factors, fusion_weights, fusion_bias, output_dim, flatten=True):
    """Pure-JAX f32 reference of the PyTorch forward (for correctness checking)."""
    batch = modalities[0].shape[0]
    fused = 1.0
    for m, f in zip(modalities, factors):
        if flatten:
            m = m.reshape(batch, -1)
        ones = jnp.ones((batch, 1), dtype=m.dtype)
        z = jnp.concatenate([ones, m], axis=1)                 # (B, D+1)
        mf = jnp.einsum('bd,rdo->rbo', z, f)                   # (rank, B, O)
        fused = fused * mf
    out = jnp.einsum('kr,bro->bko', fusion_weights,
                     jnp.transpose(fused, (1, 0, 2)))[:, 0, :] + fusion_bias
    return out.reshape(-1, output_dim)


if __name__ == "__main__":
    key = jax.random.PRNGKey(0)
    k_x1, k_x2, k_f1, k_f2, k_w = jax.random.split(key, 5)

    batch = 8
    d1, d2 = 32, 16
    output_dim = 32
    rank = 4                      # rank * output_dim = 128 -> lane-dense fused tile

    x1 = jax.random.normal(k_x1, (batch, d1), dtype=jnp.float32)
    x2 = jax.random.normal(k_x2, (batch, d2), dtype=jnp.float32)
    modalities = [x1, x2]

    # Deterministic parameter init (shapes from LowRankTensorFusion.init_factor).
    factor1 = _xavier_normal(k_f1, (rank, d1 + 1, output_dim))
    factor2 = _xavier_normal(k_f2, (rank, d2 + 1, output_dim))
    fusion_weights = _xavier_normal(k_w, (1, rank))
    fusion_bias = jnp.zeros((1, output_dim), dtype=jnp.float32)

    out = low_rank_tensor_fusion(
        modalities, [factor1, factor2], fusion_weights, fusion_bias,
        output_dim=output_dim, rank=rank, flatten=True)
    out = jax.block_until_ready(out)

    ref = _reference(modalities, [factor1, factor2], fusion_weights, fusion_bias,
                     output_dim, flatten=True)
    assert out.shape == (batch, output_dim), out.shape
    # bf16 operands with f32 accumulation -> loosened tolerance vs the f32 reference.
    assert jnp.allclose(out, ref, rtol=2e-2, atol=2e-2), "mismatch vs reference"

    print("KERNEL_OK")
</pallas_src>

<mosaic_0001>
module attributes {stable_mosaic.version = 11 : i64} {
  func.func @kernel(%arg0: i32, %arg1: memref<8x48xbf16, #tpu.memory_space<vmem>>, %arg2: memref<48x256xbf16, #tpu.memory_space<vmem>>, %arg3: memref<1x256xf32, #tpu.memory_space<vmem>>, %arg4: memref<1x32xf32, #tpu.memory_space<vmem>>, %arg5: memref<8x32xf32, #tpu.memory_space<vmem>>) attributes {dimension_semantics = [#tpu.dimension_semantics<parallel>], iteration_bounds = array<i64: 1>, scalar_prefetch = 0 : i64, scratch_operands = 0 : i64, tpu.core_type = #tpu.core_type<tc>, window_params = [{transform_indices = @transform_0, window_bounds = array<i64: 8, 48>}, {pipeline_mode = #tpu.pipeline_mode<synchronous>, transform_indices = @transform_1, window_bounds = array<i64: 48, 256>}, {pipeline_mode = #tpu.pipeline_mode<synchronous>, transform_indices = @transform_2, window_bounds = array<i64: 1, 256>}, {pipeline_mode = #tpu.pipeline_mode<synchronous>, transform_indices = @transform_3, window_bounds = array<i64: 1, 32>}, {transform_indices = @transform_4, window_bounds = array<i64: 8, 32>}]} {
    %c0 = arith.constant 0 : index
    %c0_0 = arith.constant 0 : index
    %0 = vector.load %arg1[%c0, %c0_0] : memref<8x48xbf16, #tpu.memory_space<vmem>>, vector<8x48xbf16>
    %c0_1 = arith.constant 0 : index
    %c0_2 = arith.constant 0 : index
    %1 = vector.load %arg2[%c0_1, %c0_2] : memref<48x256xbf16, #tpu.memory_space<vmem>>, vector<48x256xbf16>
    %cst = arith.constant dense<0.000000e+00> : vector<8x256xf32>
    %2 = tpu.matmul %0, %1, %cst {dimension_numbers = #tpu.dot_dimension_numbers<[1], [0], [0], [1], [0, 0, 1, 1], [], []>} : vector<8x48xbf16>, vector<48x256xbf16>, vector<8x256xf32> -> vector<8x256xf32>
    %c0_3 = arith.constant 0 : index
    %c0_4 = arith.constant 0 : index
    %3 = vector.load %arg3[%c0_3, %c0_4] : memref<1x256xf32, #tpu.memory_space<vmem>>, vector<1x256xf32>
    %4 = vector.broadcast %3 : vector<1x256xf32> to vector<8x256xf32>
    %5 = arith.addf %2, %4 : vector<8x256xf32>
    %6 = vector.extract_strided_slice %5 {offsets = [0, 0], sizes = [8, 128], strides = [1, 1]} : vector<8x256xf32> to vector<8x128xf32>
    %7 = vector.extract_strided_slice %5 {offsets = [0, 128], sizes = [8, 128], strides = [1, 1]} : vector<8x256xf32> to vector<8x128xf32>
    %8 = arith.mulf %6, %7 : vector<8x128xf32>
    %9 = vector.extract_strided_slice %8 {offsets = [0, 0], sizes = [8, 32], strides = [1, 1]} : vector<8x128xf32> to vector<8x32xf32>
    %10 = vector.extract_strided_slice %8 {offsets = [0, 32], sizes = [8, 32], strides = [1, 1]} : vector<8x128xf32> to vector<8x32xf32>
    %11 = arith.addf %9, %10 : vector<8x32xf32>
    %12 = vector.extract_strided_slice %8 {offsets = [0, 64], sizes = [8, 32], strides = [1, 1]} : vector<8x128xf32> to vector<8x32xf32>
    %13 = arith.addf %11, %12 : vector<8x32xf32>
    %14 = vector.extract_strided_slice %8 {offsets = [0, 96], sizes = [8, 32], strides = [1, 1]} : vector<8x128xf32> to vector<8x32xf32>
    %15 = arith.addf %13, %14 : vector<8x32xf32>
    %c0_5 = arith.constant 0 : index
    %c0_6 = arith.constant 0 : index
    %16 = vector.load %arg4[%c0_5, %c0_6] : memref<1x32xf32, #tpu.memory_space<vmem>>, vector<1x32xf32>
    %17 = vector.broadcast %16 : vector<1x32xf32> to vector<8x32xf32>
    %18 = arith.addf %15, %17 : vector<8x32xf32>
    %c0_7 = arith.constant 0 : index
    %c0_8 = arith.constant 0 : index
    %19 = vector.load %arg5[%c0_7, %c0_8] : memref<8x32xf32, #tpu.memory_space<vmem>>, vector<8x32xf32>
    tpu.vector_store %arg5[%c0_7, %c0_8], %18 {strides = array<i32>} : memref<8x32xf32, #tpu.memory_space<vmem>>, vector<8x32xf32>,
    return
  }
  func.func @transform_0(%arg0: i32) -> (i32, i32) {
    %c0_i32 = arith.constant 0 : i32
    %c0_i32_0 = arith.constant 0 : i32
    return %arg0, %c0_i32 : i32, i32
  }
  func.func @transform_1(%arg0: i32) -> (i32, i32) {
    %c0_i32 = arith.constant 0 : i32
    %c0_i32_0 = arith.constant 0 : i32
    %c0_i32_1 = arith.constant 0 : i32
    return %c0_i32, %c0_i32_0 : i32, i32
  }
  func.func @transform_2(%arg0: i32) -> (i32, i32) {
    %c0_i32 = arith.constant 0 : i32
    %c0_i32_0 = arith.constant 0 : i32
    %c0_i32_1 = arith.constant 0 : i32
    return %c0_i32, %c0_i32_0 : i32, i32
  }
  func.func @transform_3(%arg0: i32) -> (i32, i32) {
    %c0_i32 = arith.constant 0 : i32
    %c0_i32_0 = arith.constant 0 : i32
    %c0_i32_1 = arith.constant 0 : i32
    return %c0_i32, %c0_i32_0 : i32, i32
  }
  func.func @transform_4(%arg0: i32) -> (i32, i32) {
    %c0_i32 = arith.constant 0 : i32
    %c0_i32_0 = arith.constant 0 : i32
    return %arg0, %c0_i32 : i32, i32
  }
}

module attributes {stable_mosaic.version = 11 : i64} {
  func.func @kernel(%arg0: i32, %arg1: memref<8x48xbf16, #tpu.memory_space<vmem>>, %arg2: memref<48x256xbf16, #tpu.memory_space<vmem>>, %arg3: memref<1x256xf32, #tpu.memory_space<vmem>>, %arg4: memref<1x32xf32, #tpu.memory_space<vmem>>, %arg5: memref<8x32xf32, #tpu.memory_space<vmem>>) attributes {dimension_semantics = [#tpu.dimension_semantics<parallel>], iteration_bounds = array<i64: 1>, scalar_prefetch = 0 : i64, scratch_operands = 0 : i64, tpu.core_type = #tpu.core_type<tc>, window_params = [{transform_indices = @transform_0, window_bounds = array<i64: 8, 48>}, {pipeline_mode = #tpu.pipeline_mode<synchronous>, transform_indices = @transform_1, window_bounds = array<i64: 48, 256>}, {pipeline_mode = #tpu.pipeline_mode<synchronous>, transform_indices = @transform_2, window_bounds = array<i64: 1, 256>}, {pipeline_mode = #tpu.pipeline_mode<synchronous>, transform_indices = @transform_3, window_bounds = array<i64: 1, 32>}, {transform_indices = @transform_4, window_bounds = array<i64: 8, 32>}]} {
    %c0 = arith.constant 0 : index
    %c0_0 = arith.constant 0 : index
    %0 = vector.load %arg1[%c0, %c0_0] : memref<8x48xbf16, #tpu.memory_space<vmem>>, vector<8x48xbf16>
    %c0_1 = arith.constant 0 : index
    %c0_2 = arith.constant 0 : index
    %1 = vector.load %arg2[%c0_1, %c0_2] : memref<48x256xbf16, #tpu.memory_space<vmem>>, vector<48x256xbf16>
    %cst = arith.constant dense<0.000000e+00> : vector<8x256xf32>
    %2 = tpu.matmul %0, %1, %cst {dimension_numbers = #tpu.dot_dimension_numbers<[1], [0], [0], [1], [0, 0, 1, 1], [], []>} : vector<8x48xbf16>, vector<48x256xbf16>, vector<8x256xf32> -> vector<8x256xf32>
    %c0_3 = arith.constant 0 : index
    %c0_4 = arith.constant 0 : index
    %3 = vector.load %arg3[%c0_3, %c0_4] : memref<1x256xf32, #tpu.memory_space<vmem>>, vector<1x256xf32>
    %4 = vector.broadcast %3 : vector<1x256xf32> to vector<8x256xf32>
    %5 = arith.addf %2, %4 : vector<8x256xf32>
    %6 = vector.extract_strided_slice %5 {offsets = [0, 0], sizes = [8, 128], strides = [1, 1]} : vector<8x256xf32> to vector<8x128xf32>
    %7 = vector.extract_strided_slice %5 {offsets = [0, 128], sizes = [8, 128], strides = [1, 1]} : vector<8x256xf32> to vector<8x128xf32>
    %8 = arith.mulf %6, %7 : vector<8x128xf32>
    %9 = vector.extract_strided_slice %8 {offsets = [0, 0], sizes = [8, 32], strides = [1, 1]} : vector<8x128xf32> to vector<8x32xf32>
    %10 = vector.extract_strided_slice %8 {offsets = [0, 32], sizes = [8, 32], strides = [1, 1]} : vector<8x128xf32> to vector<8x32xf32>
    %11 = arith.addf %9, %10 : vector<8x32xf32>
    %12 = vector.extract_strided_slice %8 {offsets = [0, 64], sizes = [8, 32], strides = [1, 1]} : vector<8x128xf32> to vector<8x32xf32>
    %13 = arith.addf %11, %12 : vector<8x32xf32>
    %14 = vector.extract_strided_slice %8 {offsets = [0, 96], sizes = [8, 32], strides = [1, 1]} : vector<8x128xf32> to vector<8x32xf32>
    %15 = arith.addf %13, %14 : vector<8x32xf32>
    %c0_5 = arith.constant 0 : index
    %c0_6 = arith.constant 0 : index
    %16 = vector.load %arg4[%c0_5, %c0_6] : memref<1x32xf32, #tpu.memory_space<vmem>>, vector<1x32xf32>
    %17 = vector.broadcast %16 : vector<1x32xf32> to vector<8x32xf32>
    %18 = arith.addf %15, %17 : vector<8x32xf32>
    %c0_7 = arith.constant 0 : index
    %c0_8 = arith.constant 0 : index
    %19 = vector.load %arg5[%c0_7, %c0_8] : memref<8x32xf32, #tpu.memory_space<vmem>>, vector<8x32xf32>
    tpu.vector_store %arg5[%c0_7, %c0_8], %18 {strides = array<i32>} : memref<8x32xf32, #tpu.memory_space<vmem>>, vector<8x32xf32>,
    return
  }
  func.func @transform_0(%arg0: i32) -> (i32, i32) {
    %c0_i32 = arith.constant 0 : i32
    %c0_i32_0 = arith.constant 0 : i32
    return %arg0, %c0_i32 : i32, i32
  }
  func.func @transform_1(%arg0: i32) -> (i32, i32) {
    %c0_i32 = arith.constant 0 : i32
    %c0_i32_0 = arith.constant 0 : i32
    %c0_i32_1 = arith.constant 0 : i32
    return %c0_i32, %c0_i32_0 : i32, i32
  }
  func.func @transform_2(%arg0: i32) -> (i32, i32) {
    %c0_i32 = arith.constant 0 : i32
    %c0_i32_0 = arith.constant 0 : i32
    %c0_i32_1 = arith.constant 0 : i32
    return %c0_i32, %c0_i32_0 : i32, i32
  }
  func.func @transform_3(%arg0: i32) -> (i32, i32) {
    %c0_i32 = arith.constant 0 : i32
    %c0_i32_0 = arith.constant 0 : i32
    %c0_i32_1 = arith.constant 0 : i32
    return %c0_i32, %c0_i32_0 : i32, i32
  }
  func.func @transform_4(%arg0: i32) -> (i32, i32) {
    %c0_i32 = arith.constant 0 : i32
    %c0_i32_0 = arith.constant 0 : i32
    return %arg0, %c0_i32 : i32, i32
  }
}

</mosaic_0001>

<llo_original>
// kernel: tpu_custom_call.1
$region0: #{tpu_custom_call.1}
  #allocation0 [shape = 'u32[]', space=smem, size = 0x4, offset = 0x4, fixed_abs, tag = 'smem constant byte address 0x4 - core index']
  #allocation1 [shape = 'u32[144,128]{1,0:T(1,128)}', space=vmem, size = 0x12000, scoped, tag = 'internal scratch']
  %s0 = inlined_call_operand.hbm [shape: bf16[8,48], index: 0, kind: input, shape index: {}]
  %s1 = inlined_call_operand.hbm [shape: bf16[48,256], index: 1, kind: input, shape index: {}]
  %s2 = inlined_call_operand.vmem [shape: f32[1,256], index: 2, kind: input, shape index: {}]
  %s3 = inlined_call_operand.vmem [shape: f32[1,32], index: 3, kind: input, shape index: {}]
  %s4 = inlined_call_operand.hbm [shape: f32[8,32], index: 4, kind: output, shape index: {}]
  %s5 = sld [smem:[#allocation0]]
  $region34: #{tpu_custom_call.1} parent=0
    _
  %s7 = ssub.s32 1, %s5
  %s8 = scalar_select 0, %s7, %s5
  $region1: #{tpu_custom_call.1} parent=0
    #allocation2 [shape = 'u8[2048]{0}', space=vmem, size = 0x800, scoped, tag = 'input window, operand 0, single buffered']
    #allocation3 [shape = 's32[1]{0}', space=sflag, size = 0x4, scoped, tag = 'scoped memory for tpu_custom_call.1']
    #allocation4 [shape = 's32[1]{0}', space=sflag, size = 0x4, scoped, tag = 'scoped memory for tpu_custom_call.1']
    #allocation5 [shape = 'u8[24576]{0}', space=vmem, size = 0x6000, scoped, tag = 'input window, operand 1, single buffered']
    #allocation6 [shape = 's32[1]{0}', space=sflag, size = 0x4, scoped, tag = 'scoped memory for tpu_custom_call.1']
    #allocation7 [shape = 'u8[4096]{0}', space=vmem, size = 0x1000, scoped, tag = 'output window, operand 0, single buffered']
    %9 = vsyncpa [#allocation3], 0
    %10 = vsyncpa [#allocation6], 0
    %11 = vsyncpa [#allocation4], 0
    // Predicated region
    $region2: #{tpu_custom_call.1} parent=1 // pred_check
      _
    $region3: #{tpu_custom_call.1} parent=1 // pred_check_branch
      %13 = sbr.rel (0) target = $region5
    $region4: #{tpu_custom_call.1} parent=1 // pred_region
      %s15 = ssub.s32 64, 64
      %16 = vsyncadd [#allocation3], %s15
      %s18 = sshll.u32 [#allocation2], 4
      %s19 = int_to_ptr.vmem [resolvable:$true] %s18
      %21 = dma.hbm_to_vmem [thread:$0]  %s0, 64, %s19, [#allocation3]
    $region5: #{tpu_custom_call.1} parent=1 // pred_fallthru
      _
    // Predicated region
    $region6: #{tpu_custom_call.1} parent=1 // pred_check
      _
    $region7: #{tpu_custom_call.1} parent=1 // pred_check_branch
      %23 = sbr.rel (0) target = $region9
    $region8: #{tpu_custom_call.1} parent=1 // pred_region
      %s25 = ssub.s32 768, 768
      %26 = vsyncadd [#allocation6], %s25
      %s27 = sshll.u32 [#allocation5], 4
      %s28 = int_to_ptr.vmem [resolvable:$true] %s27
      %33 = dma.hbm_to_vmem [thread:$0]  %s1, 768, %s28, [#allocation6], 128, 128, 8
    $region9: #{tpu_custom_call.1} parent=1 // pred_fallthru
      _
    // Predicated region
    $region10: #{tpu_custom_call.1} parent=1 // pred_check
      _
    $region11: #{tpu_custom_call.1} parent=1 // pred_check_branch
      %35 = sbr.rel (0) target = $region13
    $region12: #{tpu_custom_call.1} parent=1 // pred_region
      _
    $region13: #{tpu_custom_call.1} parent=1 // pred_fallthru
      _
    // Predicated region
    $region14: #{tpu_custom_call.1} parent=1 // pred_check
      _
    $region15: #{tpu_custom_call.1} parent=1 // pred_check_branch
      %37 = sbr.rel (0) target = $region17
    $region16: #{tpu_custom_call.1} parent=1 // pred_region
      _
    $region17: #{tpu_custom_call.1} parent=1 // pred_fallthru
      _
    // Predicated region
    $region18: #{tpu_custom_call.1} parent=1 // pred_check
      _
    $region19: #{tpu_custom_call.1} parent=1 // pred_check_branch
      %39 = sbr.rel (0) target = $region21
    $region20: #{tpu_custom_call.1} parent=1 // pred_region
      %40 = dma.done [#allocation3], 64
    $region21: #{tpu_custom_call.1} parent=1 // pred_fallthru
      _
    // Predicated region
    $region22: #{tpu_custom_call.1} parent=1 // pred_check
      _
    $region23: #{tpu_custom_call.1} parent=1 // pred_check_branch
      %42 = sbr.rel (0) target = $region25
    $region24: #{tpu_custom_call.1} parent=1 // pred_region
      %43 = dma.done [#allocation6], 768
    $region25: #{tpu_custom_call.1} parent=1 // pred_fallthru
      _
    %v45 = vld [vmem:[#allocation2] sm:$0xf]
    %v46 = vld [vmem:[#allocation5] sm:$0xff]
    %v47 = vld [vmem:[#allocation5 + $0x8] sm:$0xff]
    %v48 = vld [vmem:[#allocation5 + $0x10] sm:$0xff]
    %v49 = vld [vmem:[#allocation5 + $0x18] sm:$0xff]
    %v50 = vld [vmem:[#allocation5 + $0x20] sm:$0xff]
    %v51 = vld [vmem:[#allocation5 + $0x28] sm:$0xff]
    %v52 = vld [vmem:[%s2] sm:$0x3]
    %v54 = vlaneseq
    %v55 = vshrl.u32 %v54, 7
    %v56 = vsub.s32 0, %v55
    %v57 = vrot.slane %v52, %v56
    %v58 = vlaneseq
    %v59 = vshrl.u32 %v58, 7
    %v60 = vsub.s32 1, %v59
    %v61 = vrot.slane %v52, %v60
    %v70 = vunpack.c.l.b16 %v46
    %v71 = vunpack.c.h.b16 %v46
    %v72 = vunpack.c.l.b16 %v47
    %v73 = vunpack.c.h.b16 %v47
    %v74 = vunpack.c.l.b16 %v48
    %v75 = vunpack.c.h.b16 %v48
    %v76 = vunpack.c.l.b16 %v49
    %v77 = vunpack.c.h.b16 %v49
    %v78 = vunpack.c.l.b16 %v50
    %v79 = vunpack.c.h.b16 %v50
    %v80 = vunpack.c.l.b16 %v51
    %v81 = vunpack.c.h.b16 %v51
    %v82 = vpack.c.b16 %v72, %v70
    %v83 = vpack.c.b16 %v73, %v71
    %v84 = vpack.c.b16 %v76, %v74
    %v85 = vpack.c.b16 %v77, %v75
    %v86 = vpack.c.b16 %v80, %v78
    %v87 = vpack.c.b16 %v81, %v79
    %vm94 = vcmask 392192
    %v96 = vsel %vm94, %v45, 0
    %98 = vmatprep.subr.bf16.mxu0 %v83
    %99 = vmatpush1.bf16.msra.mxu0 %v82
    %100 = vmatprep.subr.bf16.mxu0 %v85
    %101 = vmatpush1.bf16.msra.mxu0 %v84
    %102 = vmatprep.subr.bf16.mxu0 %v87
    %103 = vmatpush1.bf16.msra.mxu0 %v86
    %104 = vmatprep.subr.bf16.mxu0 0
    %105 = vmatpush1.bf16.msra.mxu0 0
    %106 = vmatprep.subr.bf16.mxu0 0
    %107 = vmatpush1.bf16.msra.mxu0 0
    %108 = vmatprep.subr.bf16.mxu0 0
    %109 = vmatpush1.bf16.msra.mxu0 0
    %110 = vmatprep.subr.bf16.mxu0 0
    %111 = vmatpush1.bf16.msra.mxu0 0
    %112 = vmatprep.subr.bf16.mxu0 0
    %113 = vmatpush1.bf16.msra.mxu0 0
    %114 = vmatprep.subr.bf16.mxu0 0
    %115 = vmatpush1.bf16.msra.mxu0 0
    %116 = vmatprep.subr.bf16.mxu0 0
    %117 = vmatpush1.bf16.msra.mxu0 0
    %118 = vmatprep.subr.bf16.mxu0 0
    %119 = vmatpush1.bf16.msra.mxu0 0
    %120 = vmatprep.subr.bf16.mxu0 0
    %121 = vmatpush1.bf16.msra.mxu0 0
    %122 = vmatprep.subr.bf16.mxu0 0
    %123 = vmatpush1.bf16.msra.mxu0 0
    %124 = vmatprep.subr.bf16.mxu0 0
    %125 = vmatpush1.bf16.msra.mxu0 0
    %126 = vmatprep.subr.bf16.mxu0 0
    %127 = vmatpush1.bf16.msra.mxu0 0
    %128 = vmatprep.subr.bf16.mxu0 0
    %129 = vmatpush1.bf16.msra.mxu0 0
    %130 = vmatprep.mubr.bf16.mxu0 0
    %131 = vmatmul.mubr.bf16.gmra.mrb[0].mxu0 %v96
    %v132 = vpop.f32.mrb[0].mxu0
    %v133 = vadd.f32 %v57, %v132
    %v134 = vpop.f32.mrb[0].mxu0
    %v135 = vadd.f32 %v61, %v134
    %v136 = vpop.f32.mrb[0].mxu0
    %v137 = vpop.f32.mrb[0].mxu0
    %138 = vdwg.mxu0
    %v139 = vmul.f32 %v133, %v135
    %141 = vrot.lane.b32.xlu0 %v139, 96
    %v142 = vpop.permute.xlu0 %141
    %v144 = vadd.f32 %v139, %v142
    %145 = vrot.lane.b32.xlu0 %v139, 64
    %v146 = vpop.permute.xlu0 %145
    %v148 = vadd.f32 %v144, %v146
    %149 = vrot.lane.b32.xlu0 %v139, 32
    %v150 = vpop.permute.xlu0 %149
    %v152 = vadd.f32 %v148, %v150
    %v153 = vld [vmem:[%s3] sm:$0x1]
    %v155 = vlaneseq
    %v156 = vshrl.u32 %v155, 7
    %v157 = vsub.s32 0, %v156
    %v158 = vrot.slane %v153, %v157
    %v160 = vadd.f32 %v152, %v158
    %vm161 = vcmask 261120
    %162 = vst.msk [vmem:[#allocation7] sm:$0xff] %vm161, %v160
    // Predicated region
    $region26: #{tpu_custom_call.1} parent=1 // pred_check
      _
    $region27: #{tpu_custom_call.1} parent=1 // pred_check_branch
      %164 = sbr.rel (0) target = $region29
    $region28: #{tpu_custom_call.1} parent=1 // pred_region
      %s166 = ssub.s32 128, 128
      %167 = vsyncadd [#allocation4], %s166
      %s169 = sshll.u32 [#allocation7], 4
      %s170 = int_to_ptr.vmem [resolvable:$true] %s169
      %172 = dma.vmem_to_hbm [thread:$0]  %s170, 128, %s4, [#allocation4]
    $region29: #{tpu_custom_call.1} parent=1 // pred_fallthru
      _
    // Predicated region
    $region30: #{tpu_custom_call.1} parent=1 // pred_check
      _
    $region31: #{tpu_custom_call.1} parent=1 // pred_check_branch
      %174 = sbr.rel (0) target = $region33
    $region32: #{tpu_custom_call.1} parent=1 // pred_region
      %175 = dma.done [#allocation4], 128
    $region33: #{tpu_custom_call.1} parent=1 // pred_fallthru
      _
    %176 = vsyncpa [#allocation3], 1
    %177 = vsyncpa [#allocation6], 1
    %178 = vsyncpa [#allocation4], 1

// kernel: tpu_custom_call.1
$region0: #{tpu_custom_call.1}
  #allocation0 [shape = 'u32[]', space=smem, size = 0x4, offset = 0x4, fixed_abs, tag = 'smem constant byte address 0x4 - core index']
  #allocation1 [shape = 'u32[144,128]{1,0:T(1,128)}', space=vmem, size = 0x12000, scoped, tag = 'internal scratch']
  %s0 = inlined_call_operand.hbm [shape: bf16[8,48], index: 0, kind: input, shape index: {}]
  %s1 = inlined_call_operand.hbm [shape: bf16[48,256], index: 1, kind: input, shape index: {}]
  %s2 = inlined_call_operand.vmem [shape: f32[1,256], index: 2, kind: input, shape index: {}]
  %s3 = inlined_call_operand.vmem [shape: f32[1,32], index: 3, kind: input, shape index: {}]
  %s4 = inlined_call_operand.hbm [shape: f32[8,32], index: 4, kind: output, shape index: {}]
  %s5 = sld [smem:[#allocation0]]
  $region34: #{tpu_custom_call.1} parent=0
    _
  %s7 = ssub.s32 1, %s5
  %s8 = scalar_select 0, %s7, %s5
  $region1: #{tpu_custom_call.1} parent=0
    #allocation2 [shape = 'u8[2048]{0}', space=vmem, size = 0x800, scoped, tag = 'input window, operand 0, single buffered']
    #allocation3 [shape = 's32[1]{0}', space=sflag, size = 0x4, scoped, tag = 'scoped memory for tpu_custom_call.1']
    #allocation4 [shape = 's32[1]{0}', space=sflag, size = 0x4, scoped, tag = 'scoped memory for tpu_custom_call.1']
    #allocation5 [shape = 'u8[24576]{0}', space=vmem, size = 0x6000, scoped, tag = 'input window, operand 1, single buffered']
    #allocation6 [shape = 's32[1]{0}', space=sflag, size = 0x4, scoped, tag = 'scoped memory for tpu_custom_call.1']
    #allocation7 [shape = 'u8[4096]{0}', space=vmem, size = 0x1000, scoped, tag = 'output window, operand 0, single buffered']
    %9 = vsyncpa [#allocation3], 0
    %10 = vsyncpa [#allocation6], 0
    %11 = vsyncpa [#allocation4], 0
    // Predicated region
    $region2: #{tpu_custom_call.1} parent=1 // pred_check
      _
    $region3: #{tpu_custom_call.1} parent=1 // pred_check_branch
      %13 = sbr.rel (0) target = $region5
    $region4: #{tpu_custom_call.1} parent=1 // pred_region
      %s15 = ssub.s32 64, 64
      %16 = vsyncadd [#allocation3], %s15
      %s18 = sshll.u32 [#allocation2], 4
      %s19 = int_to_ptr.vmem [resolvable:$true] %s18
      %21 = dma.hbm_to_vmem [thread:$0]  %s0, 64, %s19, [#allocation3]
    $region5: #{tpu_custom_call.1} parent=1 // pred_fallthru
      _
    // Predicated region
    $region6: #{tpu_custom_call.1} parent=1 // pred_check
      _
    $region7: #{tpu_custom_call.1} parent=1 // pred_check_branch
      %23 = sbr.rel (0) target = $region9
    $region8: #{tpu_custom_call.1} parent=1 // pred_region
      %s25 = ssub.s32 768, 768
      %26 = vsyncadd [#allocation6], %s25
      %s27 = sshll.u32 [#allocation5], 4
      %s28 = int_to_ptr.vmem [resolvable:$true] %s27
      %33 = dma.hbm_to_vmem [thread:$0]  %s1, 768, %s28, [#allocation6], 128, 128, 8
    $region9: #{tpu_custom_call.1} parent=1 // pred_fallthru
      _
    // Predicated region
    $region10: #{tpu_custom_call.1} parent=1 // pred_check
      _
    $region11: #{tpu_custom_call.1} parent=1 // pred_check_branch
      %35 = sbr.rel (0) target = $region13
    $region12: #{tpu_custom_call.1} parent=1 // pred_region
      _
    $region13: #{tpu_custom_call.1} parent=1 // pred_fallthru
      _
    // Predicated region
    $region14: #{tpu_custom_call.1} parent=1 // pred_check
      _
    $region15: #{tpu_custom_call.1} parent=1 // pred_check_branch
      %37 = sbr.rel (0) target = $region17
    $region16: #{tpu_custom_call.1} parent=1 // pred_region
      _
    $region17: #{tpu_custom_call.1} parent=1 // pred_fallthru
      _
    // Predicated region
    $region18: #{tpu_custom_call.1} parent=1 // pred_check
      _
    $region19: #{tpu_custom_call.1} parent=1 // pred_check_branch
      %39 = sbr.rel (0) target = $region21
    $region20: #{tpu_custom_call.1} parent=1 // pred_region
      %40 = dma.done [#allocation3], 64
    $region21: #{tpu_custom_call.1} parent=1 // pred_fallthru
      _
    // Predicated region
    $region22: #{tpu_custom_call.1} parent=1 // pred_check
      _
    $region23: #{tpu_custom_call.1} parent=1 // pred_check_branch
      %42 = sbr.rel (0) target = $region25
    $region24: #{tpu_custom_call.1} parent=1 // pred_region
      %43 = dma.done [#allocation6], 768
    $region25: #{tpu_custom_call.1} parent=1 // pred_fallthru
      _
    %v45 = vld [vmem:[#allocation2] sm:$0xf]
    %v46 = vld [vmem:[#allocation5] sm:$0xff]
    %v47 = vld [vmem:[#allocation5 + $0x8] sm:$0xff]
    %v48 = vld [vmem:[#allocation5 + $0x10] sm:$0xff]
    %v49 = vld [vmem:[#allocation5 + $0x18] sm:$0xff]
    %v50 = vld [vmem:[#allocation5 + $0x20] sm:$0xff]
    %v51 = vld [vmem:[#allocation5 + $0x28] sm:$0xff]
    %v52 = vld [vmem:[%s2] sm:$0x3]
    %v54 = vlaneseq
    %v55 = vshrl.u32 %v54, 7
    %v56 = vsub.s32 0, %v55
    %v57 = vrot.slane %v52, %v56
    %v58 = vlaneseq
    %v59 = vshrl.u32 %v58, 7
    %v60 = vsub.s32 1, %v59
    %v61 = vrot.slane %v52, %v60
    %v70 = vunpack.c.l.b16 %v46
    %v71 = vunpack.c.h.b16 %v46
    %v72 = vunpack.c.l.b16 %v47
    %v73 = vunpack.c.h.b16 %v47
    %v74 = vunpack.c.l.b16 %v48
    %v75 = vunpack.c.h.b16 %v48
    %v76 = vunpack.c.l.b16 %v49
    %v77 = vunpack.c.h.b16 %v49
    %v78 = vunpack.c.l.b16 %v50
    %v79 = vunpack.c.h.b16 %v50
    %v80 = vunpack.c.l.b16 %v51
    %v81 = vunpack.c.h.b16 %v51
    %v82 = vpack.c.b16 %v72, %v70
    %v83 = vpack.c.b16 %v73, %v71
    %v84 = vpack.c.b16 %v76, %v74
    %v85 = vpack.c.b16 %v77, %v75
    %v86 = vpack.c.b16 %v80, %v78
    %v87 = vpack.c.b16 %v81, %v79
    %vm94 = vcmask 392192
    %v96 = vsel %vm94, %v45, 0
    %98 = vmatprep.subr.bf16.mxu0 %v83
    %99 = vmatpush1.bf16.msra.mxu0 %v82
    %100 = vmatprep.subr.bf16.mxu0 %v85
    %101 = vmatpush1.bf16.msra.mxu0 %v84
    %102 = vmatprep.subr.bf16.mxu0 %v87
    %103 = vmatpush1.bf16.msra.mxu0 %v86
    %104 = vmatprep.subr.bf16.mxu0 0
    %105 = vmatpush1.bf16.msra.mxu0 0
    %106 = vmatprep.subr.bf16.mxu0 0
    %107 = vmatpush1.bf16.msra.mxu0 0
    %108 = vmatprep.subr.bf16.mxu0 0
    %109 = vmatpush1.bf16.msra.mxu0 0
    %110 = vmatprep.subr.bf16.mxu0 0
    %111 = vmatpush1.bf16.msra.mxu0 0
    %112 = vmatprep.subr.bf16.mxu0 0
    %113 = vmatpush1.bf16.msra.mxu0 0
    %114 = vmatprep.subr.bf16.mxu0 0
    %115 = vmatpush1.bf16.msra.mxu0 0
    %116 = vmatprep.subr.bf16.mxu0 0
    %117 = vmatpush1.bf16.msra.mxu0 0
    %118 = vmatprep.subr.bf16.mxu0 0
    %119 = vmatpush1.bf16.msra.mxu0 0
    %120 = vmatprep.subr.bf16.mxu0 0
    %121 = vmatpush1.bf16.msra.mxu0 0
    %122 = vmatprep.subr.bf16.mxu0 0
    %123 = vmatpush1.bf16.msra.mxu0 0
    %124 = vmatprep.subr.bf16.mxu0 0
    %125 = vmatpush1.bf16.msra.mxu0 0
    %126 = vmatprep.subr.bf16.mxu0 0
    %127 = vmatpush1.bf16.msra.mxu0 0
    %128 = vmatprep.subr.bf16.mxu0 0
    %129 = vmatpush1.bf16.msra.mxu0 0
    %130 = vmatprep.mubr.bf16.mxu0 0
    %131 = vmatmul.mubr.bf16.gmra.mrb[0].mxu0 %v96
    %v132 = vpop.f32.mrb[0].mxu0
    %v133 = vadd.f32 %v57, %v132
    %v134 = vpop.f32.mrb[0].mxu0
    %v135 = vadd.f32 %v61, %v134
    %v136 = vpop.f32.mrb[0].mxu0
    %v137 = vpop.f32.mrb[0].mxu0
    %138 = vdwg.mxu0
    %v139 = vmul.f32 %v133, %v135
    %141 = vrot.lane.b32.xlu0 %v139, 96
    %v142 = vpop.permute.xlu0 %141
    %v144 = vadd.f32 %v139, %v142
    %145 = vrot.lane.b32.xlu0 %v139, 64
    %v146 = vpop.permute.xlu0 %145
    %v148 = vadd.f32 %v144, %v146
    %149 = vrot.lane.b32.xlu0 %v139, 32
    %v150 = vpop.permute.xlu0 %149
    %v152 = vadd.f32 %v148, %v150
    %v153 = vld [vmem:[%s3] sm:$0x1]
    %v155 = vlaneseq
    %v156 = vshrl.u32 %v155, 7
    %v157 = vsub.s32 0, %v156
    %v158 = vrot.slane %v153, %v157
    %v160 = vadd.f32 %v152, %v158
    %vm161 = vcmask 261120
    %162 = vst.msk [vmem:[#allocation7] sm:$0xff] %vm161, %v160
    // Predicated region
    $region26: #{tpu_custom_call.1} parent=1 // pred_check
      _
    $region27: #{tpu_custom_call.1} parent=1 // pred_check_branch
      %164 = sbr.rel (0) target = $region29
    $region28: #{tpu_custom_call.1} parent=1 // pred_region
      %s166 = ssub.s32 128, 128
      %167 = vsyncadd [#allocation4], %s166
      %s169 = sshll.u32 [#allocation7], 4
      %s170 = int_to_ptr.vmem [resolvable:$true] %s169
      %172 = dma.vmem_to_hbm [thread:$0]  %s170, 128, %s4, [#allocation4]
    $region29: #{tpu_custom_call.1} parent=1 // pred_fallthru
      _
    // Predicated region
    $region30: #{tpu_custom_call.1} parent=1 // pred_check
      _
    $region31: #{tpu_custom_call.1} parent=1 // pred_check_branch
      %174 = sbr.rel (0) target = $region33
    $region32: #{tpu_custom_call.1} parent=1 // pred_region
      %175 = dma.done [#allocation4], 128
    $region33: #{tpu_custom_call.1} parent=1 // pred_fallthru
      _
    %176 = vsyncpa [#allocation3], 1
    %177 = vsyncpa [#allocation6], 1
    %178 = vsyncpa [#allocation4], 1

</llo_original>
